<compile_context>
chip_gen: v5e
topology: v5e:2x2
jax: 0.10.0
libtpu: 0.0.40
codegen_flags: <defaults>
</compile_context>

<pallas_src>
import jax
import jax.numpy as jnp
from jax.experimental import pallas as pl
from jax.experimental.pallas import tpu as pltpu

INPUT_DIM = 16
HIDDEN = 32
BATCH = 2
ADAPTIVE_RATE = 0.01
LN_EPS = 1e-5          # PyTorch nn.LayerNorm default
LANES = 128            # 4*HIDDEN; lane width of all packed slabs
PARAM_ROWS = 88        # 85 used rows, padded to a sublane multiple of 8


def _layernorm(x, gamma, beta):
    mu = jnp.mean(x, axis=-1, keepdims=True)
    var = jnp.mean(jnp.square(x - mu), axis=-1, keepdims=True)
    return (x - mu) * (gamma * jax.lax.rsqrt(var + LN_EPS)) + beta


def adaptive_state_kernel(act_ref, p_ref, out_ref):
    act = act_ref[...]                              # (B, 128) activation slab
    B = act.shape[0]
    H = HIDDEN
    IN = INPUT_DIM

    x = act[:, 0:IN]                                # (B, in_dim)
    ctx = act[:, IN:IN + 1]                         # (B, 1)

    # ---- packed parameter views (all static slices of ONE lane-dense slab) ----
    w_ih0 = p_ref[0:IN, :]                          # (in_dim, 4H)
    w_ih1 = p_ref[IN:IN + H, :]                     # (H, 4H)
    b0 = p_ref[IN + H:IN + H + 1, :]                # (1, 4H)  b_ih0 + b_hh0
    b1 = p_ref[IN + H + 1:IN + H + 2, :]            # (1, 4H)  b_ih1 + b_hh1

    mats = p_ref[IN + H + 2:IN + 2 * H + 2, :]      # rows 50:82, (H, 128)
    wc_h = mats[:, 0:H]                             # (H, H)
    wi1 = mats[:, H:2 * H]                          # (H, H)
    wi2 = mats[:, 2 * H:3 * H]                      # (H, H)

    v0 = p_ref[IN + 2 * H + 2:IN + 2 * H + 3, :]    # row 82
    v1 = p_ref[IN + 2 * H + 3:IN + 2 * H + 4, :]    # row 83
    v2 = p_ref[IN + 2 * H + 4:IN + 2 * H + 5, :]    # row 84
    bc, gc, betac, wc_c = (v0[:, 0:H], v0[:, H:2 * H], v0[:, 2 * H:3 * H], v0[:, 3 * H:4 * H])
    bi1, bi2, gi, betai = (v1[:, 0:H], v1[:, H:2 * H], v1[:, 2 * H:3 * H], v1[:, 3 * H:4 * H])
    imp0 = v2[:, 0:H]                               # state_importance buffer (1, H)
    mem0 = v2[:, H:2 * H]                           # memory_allocation in lanes 0:2

    # ---- stacked LSTM cells with fresh zero h/c (h@W_hh == 0, f*c == 0) ----
    def lstm_zero_state(inp, w_ih, b):
        gates = jnp.dot(inp, w_ih, preferred_element_type=jnp.float32) + b
        i = jax.nn.sigmoid(gates[:, 0:H])           # PyTorch gate order: i, f, g, o
        g = jnp.tanh(gates[:, 2 * H:3 * H])
        o = jax.nn.sigmoid(gates[:, 3 * H:4 * H])
        return o * jnp.tanh(i * g)                  # f * c dropped (c == 0)

    h1 = lstm_zero_state(x, w_ih0, b0)
    processed = lstm_zero_state(h1, w_ih1, b1)      # (B, H)

    # ---- compression gate: Linear(H+1 -> H) + LayerNorm + Sigmoid ----
    z = (jnp.dot(processed, wc_h, preferred_element_type=jnp.float32)
         + ctx * wc_c + bc)
    compression_signal = jax.nn.sigmoid(_layernorm(z, gc, betac))
    compressed = processed * compression_signal

    # ---- importance generator: Linear + ReLU + Linear + LayerNorm + Sigmoid ----
    z1 = jnp.maximum(
        jnp.dot(compressed, wi1, preferred_element_type=jnp.float32) + bi1, 0.0)
    z2 = jnp.dot(z1, wi2, preferred_element_type=jnp.float32) + bi2
    importance_signal = jax.nn.sigmoid(_layernorm(z2, gi, betai))

    # ---- buffer updates (sigmoid >= 0, so abs() elided) ----
    exp_imp = jnp.broadcast_to(imp0, (B, H))
    new_imp = exp_imp + ADAPTIVE_RATE * (importance_signal - exp_imp)

    mem_update = jnp.mean(importance_signal)        # mean over batch of row means
    new_mem_row = mem0 + ADAPTIVE_RATE * (mem_update - mem0)          # (1, H)

    # ---- single lane-dense output store: 0:32 compressed, 32:64 imp, 64:96 mem ----
    out_ref[...] = jnp.concatenate(
        [compressed,
         new_imp,
         jnp.broadcast_to(new_mem_row, (B, H)),
         jnp.zeros((B, H), jnp.float32)], axis=-1)


def _uniform(key, shape, fan_in):
    k = 1.0 / jnp.sqrt(jnp.float32(fan_in))
    return jax.random.uniform(key, shape, jnp.float32, -k, k)


def make_params(key, input_dim=INPUT_DIM, hidden=HIDDEN):
    """Deterministic parameter init mimicking PyTorch default init shapes."""
    ks = jax.random.split(key, 16)
    p = {}
    p["w_ih0"] = _uniform(ks[0], (4 * hidden, input_dim), hidden)
    p["w_hh0"] = _uniform(ks[1], (4 * hidden, hidden), hidden)
    p["b_ih0"] = _uniform(ks[2], (4 * hidden,), hidden)
    p["b_hh0"] = _uniform(ks[3], (4 * hidden,), hidden)
    p["w_ih1"] = _uniform(ks[4], (4 * hidden, hidden), hidden)
    p["w_hh1"] = _uniform(ks[5], (4 * hidden, hidden), hidden)
    p["b_ih1"] = _uniform(ks[6], (4 * hidden,), hidden)
    p["b_hh1"] = _uniform(ks[7], (4 * hidden,), hidden)
    p["wc"] = _uniform(ks[8], (hidden, hidden + 1), hidden + 1)
    p["bc"] = _uniform(ks[9], (hidden,), hidden + 1)
    p["gc"] = jnp.ones((hidden,), jnp.float32)
    p["betac"] = jnp.zeros((hidden,), jnp.float32)
    p["wi1"] = _uniform(ks[10], (hidden, hidden), hidden)
    p["bi1"] = _uniform(ks[11], (hidden,), hidden)
    p["wi2"] = _uniform(ks[12], (hidden, hidden), hidden)
    p["bi2"] = _uniform(ks[13], (hidden,), hidden)
    p["gi"] = jnp.ones((hidden,), jnp.float32)
    p["betai"] = jnp.zeros((hidden,), jnp.float32)
    p["state_importance"] = jnp.ones((1, hidden), jnp.float32)
    p["memory_allocation"] = jnp.ones((1, 2), jnp.float32)
    return p


def prepare_packed_params(params, input_dim=INPUT_DIM, hidden=HIDDEN):
    """One-time packing of ALL parameters/buffers into a single lane-dense (88,128) slab."""
    H = hidden
    gate = jnp.concatenate([
        params["w_ih0"].T,                                         # (in, 4H)
        params["w_ih1"].T,                                         # (H, 4H)
        (params["b_ih0"] + params["b_hh0"]).reshape(1, 4 * H),
        (params["b_ih1"] + params["b_hh1"]).reshape(1, 4 * H),
    ], axis=0)                                                     # rows 0:50

    wc_t = params["wc"].T                                          # (H+1, H)
    mats = jnp.concatenate(
        [wc_t[:H, :], params["wi1"].T, params["wi2"].T,
         jnp.zeros((H, H), jnp.float32)], axis=1)                  # rows 50:82, (H, 4H)

    vrow0 = jnp.concatenate(
        [params["bc"], params["gc"], params["betac"], wc_t[H, :]]).reshape(1, 4 * H)
    vrow1 = jnp.concatenate(
        [params["bi1"], params["bi2"], params["gi"], params["betai"]]).reshape(1, 4 * H)
    mem_pad = jnp.zeros((H,), jnp.float32).at[:2].set(
        params["memory_allocation"].reshape(-1))
    vrow2 = jnp.concatenate(
        [params["state_importance"][0], mem_pad,
         jnp.zeros((2 * H,), jnp.float32)]).reshape(1, 4 * H)

    slab = jnp.concatenate([gate, mats, vrow0, vrow1, vrow2], axis=0)   # (85, 128)
    slab = jnp.pad(slab, ((0, PARAM_ROWS - slab.shape[0]), (0, 0)))
    return slab.astype(jnp.float32)                                     # (88, 128)


def pack_activations(current_state, context):
    """Fold the context[:, :1] slice and f32 casts into the lane-dense activation slab."""
    if context.ndim == 2 and context.shape[1] != 1:
        context = context[:, :1]
    B = current_state.shape[0]
    pad = jnp.zeros((B, LANES - INPUT_DIM - 1), jnp.float32)
    return jnp.concatenate(
        [current_state.astype(jnp.float32), context.astype(jnp.float32), pad], axis=-1)


@jax.jit
def run_steps(act_slab, param_slab):
    """N independent first-pass invocations in ONE pallas_call, grid=(N,).

    Parameter slab uses a constant index_map so it is DMA'd into VMEM once and stays
    resident; steps are marked "parallel" so they shard across v7x's 2 TensorCores.
    """
    N, B, _ = act_slab.shape
    return pl.pallas_call(
        adaptive_state_kernel,
        out_shape=jax.ShapeDtypeStruct((N, B, LANES), jnp.float32),
        grid=(N,),
        in_specs=[
            pl.BlockSpec((None, B, LANES), lambda n: (n, 0, 0)),       # per-step act
            pl.BlockSpec(param_slab.shape, lambda n: (0, 0)),          # resident params
        ],
        out_specs=pl.BlockSpec((None, B, LANES), lambda n: (n, 0, 0)),
        compiler_params=pltpu.CompilerParams(dimension_semantics=("parallel",)),
    )(act_slab, param_slab)


def split_outputs(out):
    """Slice the lane-dense (N, B, 128) output slab into the module's outputs."""
    compressed = out[:, :, 0:HIDDEN]
    new_importance = out[:, :, HIDDEN:2 * HIDDEN]
    new_mem = out[:, 0:1, 2 * HIDDEN:2 * HIDDEN + 2]        # (N, 1, 2)
    return compressed, new_importance, new_mem


def adaptive_state_manager(current_state, context, param_slab):
    """Single-invocation convenience wrapper (N == 1)."""
    act = pack_activations(current_state, context)[None]    # (1, B, 128)
    out = run_steps(act, param_slab)
    c, i, m = split_outputs(out)
    return c[0], i[0], m[0]


def _reference(current_state, context, params):
    """Pure-JAX reference mirroring the PyTorch forward (full math, zero h/c states)."""
    H = HIDDEN
    B = current_state.shape[0]
    if context.ndim == 2 and context.shape[1] != 1:
        context = context[:, :1]

    def lstm(x, h, c, w_ih, w_hh, b_ih, b_hh):
        g = x @ w_ih.T + b_ih + h @ w_hh.T + b_hh
        i, f, gg, o = (jax.nn.sigmoid(g[:, :H]), jax.nn.sigmoid(g[:, H:2 * H]),
                       jnp.tanh(g[:, 2 * H:3 * H]), jax.nn.sigmoid(g[:, 3 * H:]))
        c_new = f * c + i * gg
        return o * jnp.tanh(c_new), c_new

    z0 = jnp.zeros((B, H), jnp.float32)
    h1, _ = lstm(current_state, z0, z0, params["w_ih0"], params["w_hh0"],
                 params["b_ih0"], params["b_hh0"])
    h2, _ = lstm(h1, z0, z0, params["w_ih1"], params["w_hh1"],
                 params["b_ih1"], params["b_hh1"])

    def ln(x, g, b):
        mu = x.mean(-1, keepdims=True)
        var = ((x - mu) ** 2).mean(-1, keepdims=True)
        return (x - mu) / jnp.sqrt(var + LN_EPS) * g + b

    cat = jnp.concatenate([h2, context], axis=-1)
    comp_sig = jax.nn.sigmoid(ln(cat @ params["wc"].T + params["bc"],
                                 params["gc"], params["betac"]))
    compressed = h2 * comp_sig
    z1 = jax.nn.relu(compressed @ params["wi1"].T + params["bi1"])
    imp_sig = jax.nn.sigmoid(ln(z1 @ params["wi2"].T + params["bi2"],
                                params["gi"], params["betai"]))
    exp_imp = jnp.broadcast_to(params["state_importance"], (B, H))
    new_imp = exp_imp + ADAPTIVE_RATE * (jnp.abs(imp_sig) - exp_imp)
    mem_upd = jnp.mean(jnp.abs(imp_sig.mean(-1)))
    new_mem = params["memory_allocation"] + ADAPTIVE_RATE * (mem_upd - params["memory_allocation"])
    return compressed, new_imp, new_mem


if __name__ == "__main__":
    key = jax.random.PRNGKey(0)
    k_param, k_x, k_ctx = jax.random.split(key, 3)
    params = make_params(k_param)
    param_slab = prepare_packed_params(params)          # one-time, init-time packing

    # ---- single-invocation path (matches the PyTorch forward once) ----
    current_state = jax.random.normal(k_x, (BATCH, INPUT_DIM), jnp.float32)
    context = jax.random.normal(k_ctx, (BATCH, 4), jnp.float32)   # sliced to (B, 1)

    compressed, new_importance, new_mem_alloc = adaptive_state_manager(
        current_state, context, param_slab)
    jax.block_until_ready((compressed, new_importance, new_mem_alloc))

    ref_c, ref_i, ref_m = _reference(current_state, context, params)
    assert jnp.allclose(compressed, ref_c, atol=1e-5, rtol=1e-5)
    assert jnp.allclose(new_importance, ref_i, atol=1e-5, rtol=1e-5)
    assert jnp.allclose(new_mem_alloc, ref_m, atol=1e-5, rtol=1e-5)

    # ---- grid-batched path: N independent first-pass invocations in one launch ----
    N = 4
    kxs = jax.random.split(jax.random.PRNGKey(1), N)
    kcs = jax.random.split(jax.random.PRNGKey(2), N)
    xs = [jax.random.normal(kxs[i], (BATCH, INPUT_DIM), jnp.float32) for i in range(N)]
    cs = [jax.random.normal(kcs[i], (BATCH, 4), jnp.float32) for i in range(N)]
    act_slab = jnp.stack([pack_activations(xs[i], cs[i]) for i in range(N)], axis=0)

    out = run_steps(act_slab, param_slab)
    jax.block_until_ready(out)
    b_c, b_i, b_m = split_outputs(out)
    for s in range(N):
        rc, ri, rm = _reference(xs[s], cs[s], params)
        assert jnp.allclose(b_c[s], rc, atol=1e-5, rtol=1e-5)
        assert jnp.allclose(b_i[s], ri, atol=1e-5, rtol=1e-5)
        assert jnp.allclose(b_m[s], rm, atol=1e-5, rtol=1e-5)

    print("KERNEL_OK")
</pallas_src>

<mosaic_0001>
module attributes {stable_mosaic.version = 11 : i64} {
  func.func @adaptive_state_kernel(%arg0: i32, %arg1: memref<1x2x128xf32, #tpu.memory_space<vmem>>, %arg2: memref<88x128xf32, #tpu.memory_space<vmem>>, %arg3: memref<1x2x128xf32, #tpu.memory_space<vmem>>) attributes {dimension_semantics = [#tpu.dimension_semantics<parallel>], iteration_bounds = array<i64: 1>, scalar_prefetch = 0 : i64, scratch_operands = 0 : i64, tpu.core_type = #tpu.core_type<tc>, window_params = [{transform_indices = @transform_0, window_bounds = array<i64: 1, 2, 128>}, {pipeline_mode = #tpu.pipeline_mode<synchronous>, transform_indices = @transform_1, window_bounds = array<i64: 88, 128>}, {transform_indices = @transform_2, window_bounds = array<i64: 1, 2, 128>}]} {
    %c0 = arith.constant 0 : index
    %c0_0 = arith.constant 0 : index
    %c0_1 = arith.constant 0 : index
    %0 = vector.load %arg1[%c0, %c0_0, %c0_1] : memref<1x2x128xf32, #tpu.memory_space<vmem>>, vector<1x2x128xf32>
    %1 = vector.shape_cast %0 : vector<1x2x128xf32> to vector<2x128xf32>
    %2 = vector.extract_strided_slice %1 {offsets = [0, 0], sizes = [2, 16], strides = [1, 1]} : vector<2x128xf32> to vector<2x16xf32>
    %3 = vector.extract_strided_slice %1 {offsets = [0, 16], sizes = [2, 1], strides = [1, 1]} : vector<2x128xf32> to vector<2x1xf32>
    %c0_2 = arith.constant 0 : index
    %c0_3 = arith.constant 0 : index
    %4 = vector.load %arg2[%c0_2, %c0_3] : memref<88x128xf32, #tpu.memory_space<vmem>>, vector<16x128xf32>
    %c16 = arith.constant 16 : index
    %c0_4 = arith.constant 0 : index
    %5 = vector.load %arg2[%c16, %c0_4] : memref<88x128xf32, #tpu.memory_space<vmem>>, vector<32x128xf32>
    %c48 = arith.constant 48 : index
    %c0_5 = arith.constant 0 : index
    %6 = vector.load %arg2[%c48, %c0_5] : memref<88x128xf32, #tpu.memory_space<vmem>>, vector<1x128xf32>
    %c49 = arith.constant 49 : index
    %c0_6 = arith.constant 0 : index
    %7 = vector.load %arg2[%c49, %c0_6] : memref<88x128xf32, #tpu.memory_space<vmem>>, vector<1x128xf32>
    %c50 = arith.constant 50 : index
    %c0_7 = arith.constant 0 : index
    %8 = vector.load %arg2[%c50, %c0_7] : memref<88x128xf32, #tpu.memory_space<vmem>>, vector<32x128xf32>
    %9 = vector.extract_strided_slice %8 {offsets = [0, 0], sizes = [32, 32], strides = [1, 1]} : vector<32x128xf32> to vector<32x32xf32>
    %10 = vector.extract_strided_slice %8 {offsets = [0, 32], sizes = [32, 32], strides = [1, 1]} : vector<32x128xf32> to vector<32x32xf32>
    %11 = vector.extract_strided_slice %8 {offsets = [0, 64], sizes = [32, 32], strides = [1, 1]} : vector<32x128xf32> to vector<32x32xf32>
    %c82 = arith.constant 82 : index
    %c0_8 = arith.constant 0 : index
    %12 = vector.load %arg2[%c82, %c0_8] : memref<88x128xf32, #tpu.memory_space<vmem>>, vector<1x128xf32>
    %c83 = arith.constant 83 : index
    %c0_9 = arith.constant 0 : index
    %13 = vector.load %arg2[%c83, %c0_9] : memref<88x128xf32, #tpu.memory_space<vmem>>, vector<1x128xf32>
    %c84 = arith.constant 84 : index
    %c0_10 = arith.constant 0 : index
    %14 = vector.load %arg2[%c84, %c0_10] : memref<88x128xf32, #tpu.memory_space<vmem>>, vector<1x128xf32>
    %15 = vector.extract_strided_slice %12 {offsets = [0, 0], sizes = [1, 32], strides = [1, 1]} : vector<1x128xf32> to vector<1x32xf32>
    %16 = vector.extract_strided_slice %12 {offsets = [0, 32], sizes = [1, 32], strides = [1, 1]} : vector<1x128xf32> to vector<1x32xf32>
    %17 = vector.extract_strided_slice %12 {offsets = [0, 64], sizes = [1, 32], strides = [1, 1]} : vector<1x128xf32> to vector<1x32xf32>
    %18 = vector.extract_strided_slice %12 {offsets = [0, 96], sizes = [1, 32], strides = [1, 1]} : vector<1x128xf32> to vector<1x32xf32>
    %19 = vector.extract_strided_slice %13 {offsets = [0, 0], sizes = [1, 32], strides = [1, 1]} : vector<1x128xf32> to vector<1x32xf32>
    %20 = vector.extract_strided_slice %13 {offsets = [0, 32], sizes = [1, 32], strides = [1, 1]} : vector<1x128xf32> to vector<1x32xf32>
    %21 = vector.extract_strided_slice %13 {offsets = [0, 64], sizes = [1, 32], strides = [1, 1]} : vector<1x128xf32> to vector<1x32xf32>
    %22 = vector.extract_strided_slice %13 {offsets = [0, 96], sizes = [1, 32], strides = [1, 1]} : vector<1x128xf32> to vector<1x32xf32>
    %23 = vector.extract_strided_slice %14 {offsets = [0, 0], sizes = [1, 32], strides = [1, 1]} : vector<1x128xf32> to vector<1x32xf32>
    %24 = vector.extract_strided_slice %14 {offsets = [0, 32], sizes = [1, 32], strides = [1, 1]} : vector<1x128xf32> to vector<1x32xf32>
    %cst = arith.constant dense<0.000000e+00> : vector<2x128xf32>
    %25 = tpu.matmul %2, %4, %cst {dimension_numbers = #tpu.dot_dimension_numbers<[1], [0], [0], [1], [0, 0, 1, 1], [], []>} : vector<2x16xf32>, vector<16x128xf32>, vector<2x128xf32> -> vector<2x128xf32>
    %26 = vector.broadcast %6 : vector<1x128xf32> to vector<2x128xf32>
    %27 = arith.addf %25, %26 : vector<2x128xf32>
    %28 = vector.extract_strided_slice %27 {offsets = [0, 0], sizes = [2, 32], strides = [1, 1]} : vector<2x128xf32> to vector<2x32xf32>
    %29 = arith.negf %28 : vector<2x32xf32>
    %30 = math.exp %29 : vector<2x32xf32>
    %cst_11 = arith.constant 1.000000e+00 : f32
    %31 = vector.broadcast %cst_11 : f32 to vector<2x32xf32>
    %32 = arith.addf %31, %30 : vector<2x32xf32>
    %33 = arith.divf %31, %32 : vector<2x32xf32>
    %34 = vector.extract_strided_slice %27 {offsets = [0, 64], sizes = [2, 32], strides = [1, 1]} : vector<2x128xf32> to vector<2x32xf32>
    %35 = math.tanh %34 : vector<2x32xf32>
    %36 = vector.extract_strided_slice %27 {offsets = [0, 96], sizes = [2, 32], strides = [1, 1]} : vector<2x128xf32> to vector<2x32xf32>
    %37 = arith.negf %36 : vector<2x32xf32>
    %38 = math.exp %37 : vector<2x32xf32>
    %cst_12 = arith.constant 1.000000e+00 : f32
    %39 = vector.broadcast %cst_12 : f32 to vector<2x32xf32>
    %40 = arith.addf %39, %38 : vector<2x32xf32>
    %41 = arith.divf %39, %40 : vector<2x32xf32>
    %42 = arith.mulf %33, %35 : vector<2x32xf32>
    %43 = math.tanh %42 : vector<2x32xf32>
    %44 = arith.mulf %41, %43 : vector<2x32xf32>
    %cst_13 = arith.constant dense<0.000000e+00> : vector<2x128xf32>
    %45 = tpu.matmul %44, %5, %cst_13 {dimension_numbers = #tpu.dot_dimension_numbers<[1], [0], [0], [1], [0, 0, 1, 1], [], []>} : vector<2x32xf32>, vector<32x128xf32>, vector<2x128xf32> -> vector<2x128xf32>
    %46 = vector.broadcast %7 : vector<1x128xf32> to vector<2x128xf32>
    %47 = arith.addf %45, %46 : vector<2x128xf32>
    %48 = vector.extract_strided_slice %47 {offsets = [0, 0], sizes = [2, 32], strides = [1, 1]} : vector<2x128xf32> to vector<2x32xf32>
    %49 = arith.negf %48 : vector<2x32xf32>
    %50 = math.exp %49 : vector<2x32xf32>
    %cst_14 = arith.constant 1.000000e+00 : f32
    %51 = vector.broadcast %cst_14 : f32 to vector<2x32xf32>
    %52 = arith.addf %51, %50 : vector<2x32xf32>
    %53 = arith.divf %51, %52 : vector<2x32xf32>
    %54 = vector.extract_strided_slice %47 {offsets = [0, 64], sizes = [2, 32], strides = [1, 1]} : vector<2x128xf32> to vector<2x32xf32>
    %55 = math.tanh %54 : vector<2x32xf32>
    %56 = vector.extract_strided_slice %47 {offsets = [0, 96], sizes = [2, 32], strides = [1, 1]} : vector<2x128xf32> to vector<2x32xf32>
    %57 = arith.negf %56 : vector<2x32xf32>
    %58 = math.exp %57 : vector<2x32xf32>
    %cst_15 = arith.constant 1.000000e+00 : f32
    %59 = vector.broadcast %cst_15 : f32 to vector<2x32xf32>
    %60 = arith.addf %59, %58 : vector<2x32xf32>
    %61 = arith.divf %59, %60 : vector<2x32xf32>
    %62 = arith.mulf %53, %55 : vector<2x32xf32>
    %63 = math.tanh %62 : vector<2x32xf32>
    %64 = arith.mulf %61, %63 : vector<2x32xf32>
    %cst_16 = arith.constant dense<0.000000e+00> : vector<2x32xf32>
    %65 = tpu.matmul %64, %9, %cst_16 {dimension_numbers = #tpu.dot_dimension_numbers<[1], [0], [0], [1], [0, 0, 1, 1], [], []>} : vector<2x32xf32>, vector<32x32xf32>, vector<2x32xf32> -> vector<2x32xf32>
    %66 = vector.broadcast %3 : vector<2x1xf32> to vector<2x32xf32>
    %67 = vector.broadcast %18 : vector<1x32xf32> to vector<2x32xf32>
    %68 = arith.mulf %66, %67 : vector<2x32xf32>
    %69 = arith.addf %65, %68 : vector<2x32xf32>
    %70 = vector.broadcast %15 : vector<1x32xf32> to vector<2x32xf32>
    %71 = arith.addf %69, %70 : vector<2x32xf32>
    %cst_17 = arith.constant dense<0.000000e+00> : vector<2xf32>
    %72 = vector.multi_reduction <add>, %71, %cst_17 [1] : vector<2x32xf32> to vector<2xf32>
    %73 = vector.shape_cast %72 : vector<2xf32> to vector<2x1xf32>
    %cst_18 = arith.constant 3.200000e+01 : f32
    %74 = vector.broadcast %cst_18 : f32 to vector<2x1xf32>
    %75 = arith.divf %73, %74 : vector<2x1xf32>
    %76 = vector.broadcast %75 : vector<2x1xf32> to vector<2x32xf32>
    %77 = arith.subf %71, %76 : vector<2x32xf32>
    %78 = arith.mulf %77, %77 : vector<2x32xf32>
    %cst_19 = arith.constant dense<0.000000e+00> : vector<2xf32>
    %79 = vector.multi_reduction <add>, %78, %cst_19 [1] : vector<2x32xf32> to vector<2xf32>
    %80 = vector.shape_cast %79 : vector<2xf32> to vector<2x1xf32>
    %cst_20 = arith.constant 3.200000e+01 : f32
    %81 = vector.broadcast %cst_20 : f32 to vector<2x1xf32>
    %82 = arith.divf %80, %81 : vector<2x1xf32>
    %83 = vector.broadcast %75 : vector<2x1xf32> to vector<2x32xf32>
    %84 = arith.subf %71, %83 : vector<2x32xf32>
    %cst_21 = arith.constant 9.99999974E-6 : f32
    %85 = vector.broadcast %cst_21 : f32 to vector<2x1xf32>
    %86 = arith.addf %82, %85 : vector<2x1xf32>
    %87 = math.rsqrt %86 : vector<2x1xf32>
    %88 = vector.broadcast %16 : vector<1x32xf32> to vector<2x32xf32>
    %89 = vector.broadcast %87 : vector<2x1xf32> to vector<2x32xf32>
    %90 = arith.mulf %88, %89 : vector<2x32xf32>
    %91 = arith.mulf %84, %90 : vector<2x32xf32>
    %92 = vector.broadcast %17 : vector<1x32xf32> to vector<2x32xf32>
    %93 = arith.addf %91, %92 : vector<2x32xf32>
    %94 = arith.negf %93 : vector<2x32xf32>
    %95 = math.exp %94 : vector<2x32xf32>
    %cst_22 = arith.constant 1.000000e+00 : f32
    %96 = vector.broadcast %cst_22 : f32 to vector<2x32xf32>
    %97 = arith.addf %96, %95 : vector<2x32xf32>
    %98 = arith.divf %96, %97 : vector<2x32xf32>
    %99 = arith.mulf %64, %98 : vector<2x32xf32>
    %cst_23 = arith.constant dense<0.000000e+00> : vector<2x32xf32>
    %100 = tpu.matmul %99, %10, %cst_23 {dimension_numbers = #tpu.dot_dimension_numbers<[1], [0], [0], [1], [0, 0, 1, 1], [], []>} : vector<2x32xf32>, vector<32x32xf32>, vector<2x32xf32> -> vector<2x32xf32>
    %101 = vector.broadcast %19 : vector<1x32xf32> to vector<2x32xf32>
    %102 = arith.addf %100, %101 : vector<2x32xf32>
    %cst_24 = arith.constant 0.000000e+00 : f32
    %103 = vector.broadcast %cst_24 : f32 to vector<2x32xf32>
    %104 = arith.maximumf %102, %103 : vector<2x32xf32>
    %cst_25 = arith.constant dense<0.000000e+00> : vector<2x32xf32>
    %105 = tpu.matmul %104, %11, %cst_25 {dimension_numbers = #tpu.dot_dimension_numbers<[1], [0], [0], [1], [0, 0, 1, 1], [], []>} : vector<2x32xf32>, vector<32x32xf32>, vector<2x32xf32> -> vector<2x32xf32>
    %106 = vector.broadcast %20 : vector<1x32xf32> to vector<2x32xf32>
    %107 = arith.addf %105, %106 : vector<2x32xf32>
    %cst_26 = arith.constant dense<0.000000e+00> : vector<2xf32>
    %108 = vector.multi_reduction <add>, %107, %cst_26 [1] : vector<2x32xf32> to vector<2xf32>
    %109 = vector.shape_cast %108 : vector<2xf32> to vector<2x1xf32>
    %cst_27 = arith.constant 3.200000e+01 : f32
    %110 = vector.broadcast %cst_27 : f32 to vector<2x1xf32>
    %111 = arith.divf %109, %110 : vector<2x1xf32>
    %112 = vector.broadcast %111 : vector<2x1xf32> to vector<2x32xf32>
    %113 = arith.subf %107, %112 : vector<2x32xf32>
    %114 = arith.mulf %113, %113 : vector<2x32xf32>
    %cst_28 = arith.constant dense<0.000000e+00> : vector<2xf32>
    %115 = vector.multi_reduction <add>, %114, %cst_28 [1] : vector<2x32xf32> to vector<2xf32>
    %116 = vector.shape_cast %115 : vector<2xf32> to vector<2x1xf32>
    %cst_29 = arith.constant 3.200000e+01 : f32
    %117 = vector.broadcast %cst_29 : f32 to vector<2x1xf32>
    %118 = arith.divf %116, %117 : vector<2x1xf32>
    %119 = vector.broadcast %111 : vector<2x1xf32> to vector<2x32xf32>
    %120 = arith.subf %107, %119 : vector<2x32xf32>
    %cst_30 = arith.constant 9.99999974E-6 : f32
    %121 = vector.broadcast %cst_30 : f32 to vector<2x1xf32>
    %122 = arith.addf %118, %121 : vector<2x1xf32>
    %123 = math.rsqrt %122 : vector<2x1xf32>
    %124 = vector.broadcast %21 : vector<1x32xf32> to vector<2x32xf32>
    %125 = vector.broadcast %123 : vector<2x1xf32> to vector<2x32xf32>
    %126 = arith.mulf %124, %125 : vector<2x32xf32>
    %127 = arith.mulf %120, %126 : vector<2x32xf32>
    %128 = vector.broadcast %22 : vector<1x32xf32> to vector<2x32xf32>
    %129 = arith.addf %127, %128 : vector<2x32xf32>
    %130 = arith.negf %129 : vector<2x32xf32>
    %131 = math.exp %130 : vector<2x32xf32>
    %cst_31 = arith.constant 1.000000e+00 : f32
    %132 = vector.broadcast %cst_31 : f32 to vector<2x32xf32>
    %133 = arith.addf %132, %131 : vector<2x32xf32>
    %134 = arith.divf %132, %133 : vector<2x32xf32>
    %135 = vector.shape_cast %23 : vector<1x32xf32> to vector<1x32xf32>
    %136 = vector.broadcast %135 : vector<1x32xf32> to vector<2x32xf32>
    %137 = arith.subf %134, %136 : vector<2x32xf32>
    %cst_32 = arith.constant 0.00999999977 : f32
    %138 = vector.broadcast %cst_32 : f32 to vector<2x32xf32>
    %139 = arith.mulf %138, %137 : vector<2x32xf32>
    %140 = arith.addf %136, %139 : vector<2x32xf32>
    %141 = vector.shape_cast %134 : vector<2x32xf32> to vector<1x2x32xf32>
    %cst_33 = arith.constant dense<0.000000e+00> : vector<1xf32>
    %142 = vector.multi_reduction <add>, %141, %cst_33 [1, 2] : vector<1x2x32xf32> to vector<1xf32>
    %143 = vector.shape_cast %142 : vector<1xf32> to vector<1x1x1xf32>
    %144 = vector.extract %143[0, 0, 0] : f32 from vector<1x1x1xf32>
    %cst_34 = arith.constant 6.400000e+01 : f32
    %145 = arith.divf %144, %cst_34 : f32
    %146 = vector.broadcast %145 : f32 to vector<1x32xf32>
    %147 = arith.subf %146, %24 : vector<1x32xf32>
    %cst_35 = arith.constant 0.00999999977 : f32
    %148 = vector.broadcast %cst_35 : f32 to vector<1x32xf32>
    %149 = arith.mulf %148, %147 : vector<1x32xf32>
    %150 = arith.addf %24, %149 : vector<1x32xf32>
    %151 = vector.shape_cast %150 : vector<1x32xf32> to vector<1x32xf32>
    %152 = vector.broadcast %151 : vector<1x32xf32> to vector<2x32xf32>
    %cst_36 = arith.constant 0.000000e+00 : f32
    %153 = vector.broadcast %cst_36 : f32 to vector<2x32xf32>
    %154 = tpu.concatenate %99, %140, %152, %153 in 1 : vector<2x32xf32>, vector<2x32xf32>, vector<2x32xf32>, vector<2x32xf32> -> vector<2x128xf32>
    %c0_37 = arith.constant 0 : index
    %c0_38 = arith.constant 0 : index
    %c0_39 = arith.constant 0 : index
    %155 = vector.load %arg3[%c0_37, %c0_38, %c0_39] : memref<1x2x128xf32, #tpu.memory_space<vmem>>, vector<1x2x128xf32>
    %156 = vector.shape_cast %155 : vector<1x2x128xf32> to vector<2x128xf32>
    %157 = vector.shape_cast %154 : vector<2x128xf32> to vector<1x2x128xf32>
    tpu.vector_store %arg3[%c0_37, %c0_38, %c0_39], %157 {strides = array<i32>} : memref<1x2x128xf32, #tpu.memory_space<vmem>>, vector<1x2x128xf32>,
    return
  }
  func.func @transform_0(%arg0: i32) -> (i32, i32, i32) {
    %c0_i32 = arith.constant 0 : i32
    %c0_i32_0 = arith.constant 0 : i32
    %c0_i32_1 = arith.constant 0 : i32
    return %arg0, %c0_i32, %c0_i32_0 : i32, i32, i32
  }
  func.func @transform_1(%arg0: i32) -> (i32, i32) {
    %c0_i32 = arith.constant 0 : i32
    %c0_i32_0 = arith.constant 0 : i32
    %c0_i32_1 = arith.constant 0 : i32
    return %c0_i32, %c0_i32_0 : i32, i32
  }
  func.func @transform_2(%arg0: i32) -> (i32, i32, i32) {
    %c0_i32 = arith.constant 0 : i32
    %c0_i32_0 = arith.constant 0 : i32
    %c0_i32_1 = arith.constant 0 : i32
    return %arg0, %c0_i32, %c0_i32_0 : i32, i32, i32
  }
}

</mosaic_0001>

<llo_original>
// kernel: run_steps.1
$region0: #{run_steps.1}
  #allocation0 [shape = 'u32[]', space=smem, size = 0x4, offset = 0x4, fixed_abs, tag = 'smem constant byte address 0x4 - core index']
  #allocation1 [shape = 'u32[72,128]{1,0:T(1,128)}', space=vmem, size = 0x9000, scoped, tag = 'internal scratch']
  %s0 = inlined_call_operand.hbm [shape: f32[1,2,128], index: 0, kind: input, shape index: {}]
  %s1 = inlined_call_operand.hbm [shape: f32[88,128], index: 1, kind: input, shape index: {}]
  %s2 = inlined_call_operand.hbm [shape: f32[1,2,128], index: 2, kind: output, shape index: {}]
  %s3 = sld [smem:[#allocation0]]
  $region26: #{run_steps.1} parent=0
    _
  %s5 = ssub.s32 1, %s3
  %s6 = scalar_select 0, %s5, %s3
  $region1: #{run_steps.1} parent=0
    #allocation2 [shape = 'u8[1024]{0}', space=vmem, size = 0x400, scoped, tag = 'input window, operand 0, single buffered']
    #allocation3 [shape = 's32[1]{0}', space=sflag, size = 0x4, scoped, tag = 'scoped memory for run_steps.1']
    #allocation4 [shape = 's32[1]{0}', space=sflag, size = 0x4, scoped, tag = 'scoped memory for run_steps.1']
    #allocation5 [shape = 'u8[45056]{0}', space=vmem, size = 0xb000, scoped, tag = 'input window, operand 1, single buffered']
    #allocation6 [shape = 's32[1]{0}', space=sflag, size = 0x4, scoped, tag = 'scoped memory for run_steps.1']
    #allocation7 [shape = 'u8[1024]{0}', space=vmem, size = 0x400, scoped, tag = 'output window, operand 0, single buffered']
    %7 = vsyncpa [#allocation3], 0
    %8 = vsyncpa [#allocation6], 0
    %9 = vsyncpa [#allocation4], 0
    // Predicated region
    $region2: #{run_steps.1} parent=1 // pred_check
      _
    $region3: #{run_steps.1} parent=1 // pred_check_branch
      %11 = sbr.rel (0) target = $region5
    $region4: #{run_steps.1} parent=1 // pred_region
      %13 = vsyncadd [#allocation3], 0
      %s15 = sshll.u32 %s0, 4
      %s16 = int_to_ptr.hbm [resolvable:$true] %s15
      %s17 = sshll.u32 [#allocation2], 4
      %s18 = int_to_ptr.vmem [resolvable:$true] %s17
      %20 = dma.hbm_to_vmem [thread:$0]  %s16, 32, %s18, [#allocation3]
    $region5: #{run_steps.1} parent=1 // pred_fallthru
      _
    // Predicated region
    $region6: #{run_steps.1} parent=1 // pred_check
      _
    $region7: #{run_steps.1} parent=1 // pred_check_branch
      %22 = sbr.rel (0) target = $region9
    $region8: #{run_steps.1} parent=1 // pred_region
      %24 = vsyncadd [#allocation6], 0
      %s25 = sshll.u32 %s1, 4
      %s26 = int_to_ptr.hbm [resolvable:$true] %s25
      %s27 = sshll.u32 [#allocation5], 4
      %s28 = int_to_ptr.vmem [resolvable:$true] %s27
      %33 = dma.hbm_to_vmem [thread:$0]  %s26, 1408, %s28, [#allocation6], 128, 128, 8
    $region9: #{run_steps.1} parent=1 // pred_fallthru
      _
    // Predicated region
    $region10: #{run_steps.1} parent=1 // pred_check
      _
    $region11: #{run_steps.1} parent=1 // pred_check_branch
      %35 = sbr.rel (0) target = $region13
    $region12: #{run_steps.1} parent=1 // pred_region
      %37 = dma.done [#allocation3], 32
    $region13: #{run_steps.1} parent=1 // pred_fallthru
      _
    // Predicated region
    $region14: #{run_steps.1} parent=1 // pred_check
      _
    $region15: #{run_steps.1} parent=1 // pred_check_branch
      %39 = sbr.rel (0) target = $region17
    $region16: #{run_steps.1} parent=1 // pred_region
      %41 = dma.done [#allocation6], 1408
    $region17: #{run_steps.1} parent=1 // pred_fallthru
      _
    %v42 = vld [vmem:[#allocation2] sm:$0x3]
    %v43 = vld [vmem:[#allocation5] sm:$0xff]
    %v44 = vld [vmem:[#allocation5 + $0x8] sm:$0xff]
    %v45 = vld [vmem:[#allocation5 + $0x10] sm:$0xff]
    %v46 = vld [vmem:[#allocation5 + $0x18] sm:$0xff]
    %v47 = vld [vmem:[#allocation5 + $0x20] sm:$0xff]
    %v48 = vld [vmem:[#allocation5 + $0x28] sm:$0xff]
    %v49 = vld [vmem:[#allocation5 + $0x30] sm:$0x1]
    %v50 = vld [vmem:[#allocation5 + $0x31] sm:$0x1]
    %v51 = vld [vmem:[#allocation5 + $0x32] sm:$0xff]
    %v52 = vld [vmem:[#allocation5 + $0x3a] sm:$0xff]
    %v53 = vld [vmem:[#allocation5 + $0x42] sm:$0xff]
    %v54 = vld [vmem:[#allocation5 + $0x4a] sm:$0xff]
    %v55 = vld [vmem:[#allocation5 + $0x52] sm:$0x1]
    %v56 = vld [vmem:[#allocation5 + $0x53] sm:$0x1]
    %v57 = vld [vmem:[#allocation5 + $0x54] sm:$0x1]
    %v58 = vperm.slane %v49, 0
    %vm59 = vcmask 130048
    %v61 = vsel %vm59, %v42, 0
    %63 = vmatpush.msra.mxu0 0.0
    %64 = vmatpush.msra.mxu0 0.0
    %65 = vmatpush.msra.mxu0 0.0
    %66 = vmatpush.msra.mxu0 0.0
    %67 = vmatpush.msra.mxu0 0.0
    %68 = vmatpush.msra.mxu0 0.0
    %69 = vmatpush.msra.mxu0 0.0
    %70 = vmatpush.msra.mxu0 0.0
    %71 = vmatpush.msra.mxu0 0.0
    %72 = vmatpush.msra.mxu0 0.0
    %73 = vmatpush.msra.mxu0 0.0
    %74 = vmatpush.msra.mxu0 0.0
    %75 = vmatpush.msra.mxu0 0.0
    %76 = vmatpush.msra.mxu0 0.0
    %77 = vmatpush.msra.mxu0 %v44
    %78 = vmatpush.msra.mxu0 %v43
    %79 = vmatmul.f32.gmra.mxu0 %v61
    %v80 = vpop.f32.mrf.mxu0
    %v81 = vadd.f32 %v58, %v80
    %82 = vdwg.mxu0
    %v83 = vxor.u32 %v81, 2147483648
    %v84 = vmul.f32 %v83, 1.442695
    %v85 = vpow.pop %v84
    %v86 = vadd.f32 %v85, 1.0
    %v87 = vrcp.pop %v86
    %v88 = vmul.f32 %v86, %v87
    %v89 = vsub.f32 1.0, %v88
    %v90 = vmul.f32 %v87, %v89
    %v91 = vadd.f32 %v87, %v90
    %vm92 = vweird.f32 %v86
    %vm93 = vweird.f32 %v87
    %vm94 = vmor %vm92, %vm93
    %v95 = vsel %vm94, %v87, %v91
    %v96 = vand.u32 2147483647, %v86
    %vm97 = vcmp.eq.f32.partialorder %v96, 8.507059e+37
    %v98 = vand.u32 %v86, 2147483648
    %v99 = vor.u32 1.1754944e-38, %v98
    %v100 = vsel %vm97, %v99, %v95
    %v101 = vmul.f32 1.0, %v100
    %v102 = vtanh.pop %v81
    %104 = vrot.lane.b32.xlu0 %v102, 64
    %v105 = vpop.permute.xlu0 %104
    %v107 = vmul.f32 %v101, %v105
    %v108 = vtanh.pop %v107
    %110 = vrot.lane.b32.xlu0 %v108, 96
    %v111 = vpop.permute.xlu0 %110
    %v113 = vmul.f32 %v101, %v111
    %v114 = vperm.slane %v50, 0
    %116 = vrot.lane.b32.xlu0 %v113, 32
    %v117 = vpop.permute.xlu0 %116
    %vm118 = vcmask 261120
    %v119 = vsel %vm118, %v117, 0
    %121 = vmatpush.msra.mxu0 0.0
    %122 = vmatpush.msra.mxu0 0.0
    %123 = vmatpush.msra.mxu0 0.0
    %124 = vmatpush.msra.mxu0 0.0
    %125 = vmatpush.msra.mxu0 0.0
    %126 = vmatpush.msra.mxu0 0.0
    %127 = vmatpush.msra.mxu0 0.0
    %128 = vmatpush.msra.mxu0 0.0
    %129 = vmatpush.msra.mxu0 0.0
    %130 = vmatpush.msra.mxu0 0.0
    %131 = vmatpush.msra.mxu0 0.0
    %132 = vmatpush.msra.mxu0 0.0
    %133 = vmatpush.msra.mxu0 %v48
    %134 = vmatpush.msra.mxu0 %v47
    %135 = vmatpush.msra.mxu0 %v46
    %136 = vmatpush.msra.mxu0 %v45
    %137 = vmatmul.f32.gmra.mxu0 %v119
    %v138 = vpop.f32.mrf.mxu0
    %v139 = vadd.f32 %v114, %v138
    %140 = vdwg.mxu0
    %v141 = vxor.u32 %v139, 2147483648
    %v142 = vmul.f32 %v141, 1.442695
    %v143 = vpow.pop %v142
    %v144 = vadd.f32 %v143, 1.0
    %v145 = vrcp.pop %v144
    %v146 = vmul.f32 %v144, %v145
    %v147 = vsub.f32 1.0, %v146
    %v148 = vmul.f32 %v145, %v147
    %v149 = vadd.f32 %v145, %v148
    %vm150 = vweird.f32 %v144
    %vm151 = vweird.f32 %v145
    %vm152 = vmor %vm150, %vm151
    %v153 = vsel %vm152, %v145, %v149
    %v154 = vand.u32 2147483647, %v144
    %vm155 = vcmp.eq.f32.partialorder %v154, 8.507059e+37
    %v156 = vand.u32 %v144, 2147483648
    %v157 = vor.u32 1.1754944e-38, %v156
    %v158 = vsel %vm155, %v157, %v153
    %v159 = vmul.f32 1.0, %v158
    %v160 = vtanh.pop %v139
    %162 = vrot.lane.b32.xlu0 %v160, 64
    %v163 = vpop.permute.xlu0 %162
    %v165 = vmul.f32 %v159, %v163
    %v166 = vtanh.pop %v165
    %168 = vrot.lane.b32.xlu0 %v166, 96
    %v169 = vpop.permute.xlu0 %168
    %v171 = vmul.f32 %v159, %v169
    %172 = vset.pattern.permute.xlu0 16
    %173 = vperm.xlu0 %172, %v42
    %v174 = vpop.permute.xlu0 %173
    %v176 = vperm.slane %v55, 0
    %v177 = vmul.f32 %v174, %v176
    %179 = vrot.lane.b32.xlu0 %v171, 32
    %v180 = vpop.permute.xlu0 %179
    %182 = vrot.lane.b32.xlu0 %v177, 32
    %v183 = vpop.permute.xlu0 %182
    %v185 = vsel %vm118, %v180, 0
    %187 = vmatpush.msra.mxu0 0.0
    %188 = vmatpush.msra.mxu0 0.0
    %189 = vmatpush.msra.mxu0 0.0
    %190 = vmatpush.msra.mxu0 0.0
    %191 = vmatpush.msra.mxu0 0.0
    %192 = vmatpush.msra.mxu0 0.0
    %193 = vmatpush.msra.mxu0 0.0
    %194 = vmatpush.msra.mxu0 0.0
    %195 = vmatpush.msra.mxu0 0.0
    %196 = vmatpush.msra.mxu0 0.0
    %197 = vmatpush.msra.mxu0 0.0
    %198 = vmatpush.msra.mxu0 0.0
    %199 = vmatpush.msra.mxu0 %v54
    %200 = vmatpush.msra.mxu0 %v53
    %201 = vmatpush.msra.mxu0 %v52
    %202 = vmatpush.msra.mxu0 %v51
    %203 = vmatmul.f32.gmra.mxu0 %v185
    %v204 = vpop.f32.mrf.mxu0
    %v205 = vadd.f32 %v183, %v204
    %206 = vdwg.mxu0
    %v207 = vadd.f32 %v205, %v176
    %vm208 = vcmask 254976
    %v209 = vsel %vm208, %v207, 0.0
    %210 = vadd.xlane.f32.xlu0 %v209
    %v211 = vpop.xlane.xlu0 %210
    %v212 = vrcp.pop 32.0
    %v213 = vmul.f32 32.0, %v212
    %v214 = vsub.f32 1.0, %v213
    %v215 = vmul.f32 %v212, %v214
    %v216 = vadd.f32 %v212, %v215
    %vm217 = vweird.f32 %v212
    %v218 = vsel %vm217, %v212, %v216
    %v219 = vmul.f32 %v211, %v218
    %v220 = vsub.f32 %v207, %v219
    %v221 = vmul.f32 %v220, %v220
    %v222 = vsel %vm208, %v221, 0.0
    %223 = vadd.xlane.f32.xlu0 %v222
    %v224 = vpop.xlane.xlu0 %223
    %v225 = vmul.f32 %v224, %v218
    %v226 = vadd.f32 %v225, 1e-05
    %v227 = vrsqrt.pop %v226
    %v228 = vmul.f32 %v227, %v226
    %v229 = vmul.f32 %v228, %v227
    %v230 = vmul.f32 0.5, %v229
    %v231 = vsub.f32 1.5, %v230
    %v232 = vmul.f32 %v227, %v231
    %vm233 = vweird.f32 %v226
    %vm234 = vweird.f32 %v227
    %vm235 = vmor %vm233, %vm234
    %v236 = vsel %vm235, %v227, %v232
    %v237 = vmul.f32 %v176, %v236
    %239 = vrot.lane.b32.xlu0 %v237, 96
    %v240 = vpop.permute.xlu0 %239
    %v242 = vmul.f32 %v220, %v240
    %244 = vrot.lane.b32.xlu0 %v176, 64
    %v245 = vpop.permute.xlu0 %244
    %v247 = vadd.f32 %v242, %v245
    %v248 = vxor.u32 %v247, 2147483648
    %v249 = vmul.f32 %v248, 1.442695
    %v250 = vpow.pop %v249
    %v251 = vadd.f32 %v250, 1.0
    %v252 = vrcp.pop %v251
    %v253 = vmul.f32 %v251, %v252
    %v254 = vsub.f32 1.0, %v253
    %v255 = vmul.f32 %v252, %v254
    %v256 = vadd.f32 %v252, %v255
    %vm257 = vweird.f32 %v251
    %vm258 = vweird.f32 %v252
    %vm259 = vmor %vm257, %vm258
    %v260 = vsel %vm259, %v252, %v256
    %v261 = vand.u32 2147483647, %v251
    %vm262 = vcmp.eq.f32.partialorder %v261, 8.507059e+37
    %v263 = vand.u32 %v251, 2147483648
    %v264 = vor.u32 1.1754944e-38, %v263
    %v265 = vsel %vm262, %v264, %v260
    %v266 = vmul.f32 1.0, %v265
    %268 = vrot.lane.b32.xlu0 %v266, 96
    %v269 = vpop.permute.xlu0 %268
    %v271 = vmul.f32 %v171, %v269
    %v272 = vperm.slane %v56, 0
    %274 = vrot.lane.b32.xlu0 %v271, 32
    %v275 = vpop.permute.xlu0 %274
    %280 = vrot.lane.b32.xlu0 %v51, 96
    %v281 = vpop.permute.xlu0 %280
    %282 = vrot.lane.b32.xlu0 %v52, 96
    %v283 = vpop.permute.xlu0 %282
    %284 = vrot.lane.b32.xlu0 %v53, 96
    %v285 = vpop.permute.xlu0 %284
    %286 = vrot.lane.b32.xlu0 %v54, 96
    %v287 = vpop.permute.xlu0 %286
    %v292 = vsel %vm118, %v275, 0
    %294 = vmatpush.msra.mxu0 0.0
    %295 = vmatpush.msra.mxu0 0.0
    %296 = vmatpush.msra.mxu0 0.0
    %297 = vmatpush.msra.mxu0 0.0
    %298 = vmatpush.msra.mxu0 0.0
    %299 = vmatpush.msra.mxu0 0.0
    %300 = vmatpush.msra.mxu0 0.0
    %301 = vmatpush.msra.mxu0 0.0
    %302 = vmatpush.msra.mxu0 0.0
    %303 = vmatpush.msra.mxu0 0.0
    %304 = vmatpush.msra.mxu0 0.0
    %305 = vmatpush.msra.mxu0 0.0
    %306 = vmatpush.msra.mxu0 %v287
    %307 = vmatpush.msra.mxu0 %v285
    %308 = vmatpush.msra.mxu0 %v283
    %309 = vmatpush.msra.mxu0 %v281
    %310 = vmatmul.f32.gmra.mxu0 %v292
    %v311 = vpop.f32.mrf.mxu0
    %v312 = vadd.f32 %v272, %v311
    %313 = vdwg.mxu0
    %v314 = vmax.f32 %v312, 0.0
    %315 = vrot.lane.b32.xlu0 %v51, 64
    %v316 = vpop.permute.xlu0 %315
    %317 = vrot.lane.b32.xlu0 %v52, 64
    %v318 = vpop.permute.xlu0 %317
    %319 = vrot.lane.b32.xlu0 %v53, 64
    %v320 = vpop.permute.xlu0 %319
    %321 = vrot.lane.b32.xlu0 %v54, 64
    %v322 = vpop.permute.xlu0 %321
    %328 = vrot.lane.b32.xlu0 %v272, 96
    %v329 = vpop.permute.xlu0 %328
    %v332 = vsel %vm118, %v314, 0
    %334 = vmatpush.msra.mxu0 0.0
    %335 = vmatpush.msra.mxu0 0.0
    %336 = vmatpush.msra.mxu0 0.0
    %337 = vmatpush.msra.mxu0 0.0
    %338 = vmatpush.msra.mxu0 0.0
    %339 = vmatpush.msra.mxu0 0.0
    %340 = vmatpush.msra.mxu0 0.0
    %341 = vmatpush.msra.mxu0 0.0
    %342 = vmatpush.msra.mxu0 0.0
    %343 = vmatpush.msra.mxu0 0.0
    %344 = vmatpush.msra.mxu0 0.0
    %345 = vmatpush.msra.mxu0 0.0
    %346 = vmatpush.msra.mxu0 %v322
    %347 = vmatpush.msra.mxu0 %v320
    %348 = vmatpush.msra.mxu0 %v318
    %349 = vmatpush.msra.mxu0 %v316
    %350 = vmatmul.f32.gmra.mxu0 %v332
    %v351 = vpop.f32.mrf.mxu0
    %v352 = vadd.f32 %v329, %v351
    %353 = vdwg.mxu0
    %v354 = vsel %vm208, %v352, 0.0
    %355 = vadd.xlane.f32.xlu0 %v354
    %v356 = vpop.xlane.xlu0 %355
    %v357 = vmul.f32 %v356, %v218
    %v358 = vsub.f32 %v352, %v357
    %v359 = vmul.f32 %v358, %v358
    %v360 = vsel %vm208, %v359, 0.0
    %361 = vadd.xlane.f32.xlu0 %v360
    %v362 = vpop.xlane.xlu0 %361
    %v363 = vmul.f32 %v362, %v218
    %v364 = vadd.f32 %v363, 1e-05
    %v365 = vrsqrt.pop %v364
    %v366 = vmul.f32 %v365, %v364
    %v367 = vmul.f32 %v366, %v365
    %v368 = vmul.f32 0.5, %v367
    %v369 = vsub.f32 1.5, %v368
    %v370 = vmul.f32 %v365, %v369
    %vm371 = vweird.f32 %v364
    %vm372 = vweird.f32 %v365
    %vm373 = vmor %vm371, %vm372
    %v374 = vsel %vm373, %v365, %v370
    %v375 = vmul.f32 %v272, %v374
    %377 = vrot.lane.b32.xlu0 %v375, 64
    %v378 = vpop.permute.xlu0 %377
    %v380 = vmul.f32 %v358, %v378
    %381 = vrot.lane.b32.xlu0 %v272, 32
    %v382 = vpop.permute.xlu0 %381
    %v384 = vadd.f32 %v380, %v382
    %v385 = vxor.u32 %v384, 2147483648
    %v386 = vmul.f32 %v385, 1.442695
    %v387 = vpow.pop %v386
    %v388 = vadd.f32 %v387, 1.0
    %v389 = vrcp.pop %v388
    %v390 = vmul.f32 %v388, %v389
    %v391 = vsub.f32 1.0, %v390
    %v392 = vmul.f32 %v389, %v391
    %v393 = vadd.f32 %v389, %v392
    %vm394 = vweird.f32 %v388
    %vm395 = vweird.f32 %v389
    %vm396 = vmor %vm394, %vm395
    %v397 = vsel %vm396, %v389, %v393
    %v398 = vand.u32 2147483647, %v388
    %vm399 = vcmp.eq.f32.partialorder %v398, 8.507059e+37
    %v400 = vand.u32 %v388, 2147483648
    %v401 = vor.u32 1.1754944e-38, %v400
    %v402 = vsel %vm399, %v401, %v397
    %v403 = vmul.f32 1.0, %v402
    %v404 = vperm.slane %v57, 0
    %v405 = vsub.f32 %v403, %v404
    %v406 = vmul.f32 %v405, 0.01
    %v407 = vadd.f32 %v404, %v406
    %v408 = vsel %vm208, %v403, 0.0
    %409 = vadd.xlane.f32.xlu0 %v408
    %v410 = vpop.xlane.xlu0 %409
    %v411 = vrot.slane %v410, 4
    %v412 = vadd.f32 %v410, %v411
    %v413 = vrot.slane %v412, 2
    %v414 = vadd.f32 %v412, %v413
    %v415 = vrot.slane %v414, 1
    %v416 = vadd.f32 %v414, %v415
    %s417 = vtos %v416
    %v418 = vrcp.pop 64.0
    %v419 = vmul.f32 64.0, %v418
    %v420 = vsub.f32 1.0, %v419
    %v421 = vmul.f32 %v418, %v420
    %v422 = vadd.f32 %v418, %v421
    %vm423 = vweird.f32 %v418
    %v424 = vsel %vm423, %v418, %v422
    %s425 = vtos %v424
    %s426 = smul.f32 %s417, %s425
    %v427 = vstv %s426
    %v428 = vsub.f32 %v427, %v57
    %v429 = vmul.f32 %v428, 0.01
    %v430 = vadd.f32 %v57, %v429
    %v431 = vperm.slane %v430, 0
    %434 = vrot.lane.b32.xlu0 %v407, 32
    %v435 = vpop.permute.xlu0 %434
    %438 = vrot.lane.b32.xlu0 %v431, 32
    %v439 = vpop.permute.xlu0 %438
    %v441 = vsel %vm118, %v275, %v435
    %vm442 = vcmask 523264
    %v443 = vsel %vm442, %v441, %v439
    %vm444 = vcmask 785408
    %v445 = vsel %vm444, %v443, 0.0
    %446 = vst [vmem:[#allocation7] sm:$0x3] %v445
    // Predicated region
    $region18: #{run_steps.1} parent=1 // pred_check
      _
    $region19: #{run_steps.1} parent=1 // pred_check_branch
      %448 = sbr.rel (0) target = $region21
    $region20: #{run_steps.1} parent=1 // pred_region
      %450 = vsyncadd [#allocation4], 0
      %s452 = sshll.u32 [#allocation7], 4
      %s453 = int_to_ptr.vmem [resolvable:$true] %s452
      %s454 = sshll.u32 %s2, 4
      %s455 = int_to_ptr.hbm [resolvable:$true] %s454
      %457 = dma.vmem_to_hbm [thread:$0]  %s453, 32, %s455, [#allocation4]
    $region21: #{run_steps.1} parent=1 // pred_fallthru
      _
    // Predicated region
    $region22: #{run_steps.1} parent=1 // pred_check
      _
    $region23: #{run_steps.1} parent=1 // pred_check_branch
      %459 = sbr.rel (0) target = $region25
    $region24: #{run_steps.1} parent=1 // pred_region
      %461 = dma.done [#allocation4], 32
    $region25: #{run_steps.1} parent=1 // pred_fallthru
      _
    %462 = vsyncpa [#allocation3], 1
    %463 = vsyncpa [#allocation6], 1
    %464 = vsyncpa [#allocation4], 1

</llo_original>
